<compile_context>
chip_gen: v7x
topology: tpu7x:2x2x1
jax: 0.10.0
libtpu: 0.0.40
codegen_flags: <defaults>
</compile_context>

<pallas_src>
import functools
import math

import jax
import jax.numpy as jnp
from jax import lax
from jax.experimental import pallas as pl
from jax.experimental.pallas import tpu as pltpu
import numpy as np


def _bt_corr_kernel(za_ref, zb_ref, out_ref):
    # za_ref: (m, T) bf16 slab of normalized z_a columns for block j
    # zb_ref: (m, T) bf16 slab of normalized z_b columns for block k
    # out_ref: (1, 8, 128) f32 partial-sum block, resident across the k axis.
    j = pl.program_id(0)  # z_a column block (output-tile row), "parallel"
    k = pl.program_id(1)  # z_b column block (output-tile col), innermost

    @pl.when(k == 0)
    def _init():
        out_ref[...] = jnp.zeros_like(out_ref)

    # (T, T) tile of c = z_a^T @ z_b / m.  The 1/m and per-column 1/std are
    # already folded into the bf16 operands, so this is a plain bf16 MXU
    # contraction over the sample axis with f32 accumulation.
    c = lax.dot_general(
        za_ref[...],
        zb_ref[...],
        dimension_numbers=(((0,), (0,)), ((), ())),
        preferred_element_type=jnp.float32,
    )

    # Partial sums live in dedicated sublanes of the lane-dense output block:
    #   sublane 0: sum(c^2)   sublane 1: sum((1-diag)^2)   sublane 2: sum(diag^2)
    sublane = lax.broadcasted_iota(jnp.int32, out_ref.shape, 1)
    out_ref[...] += jnp.where(sublane == 0, jnp.sum(c * c), 0.0)

    # Diagonal statistics only on diagonal tiles (O(d) of the work, not O(d^2)).
    @pl.when(j == k)
    def _diag():
        t = c.shape[0]
        rows = lax.broadcasted_iota(jnp.int32, (t, t), 0)
        cols = lax.broadcasted_iota(jnp.int32, (t, t), 1)
        eye = rows == cols
        one_minus = 1.0 - c
        on_diag = jnp.sum(jnp.where(eye, one_minus * one_minus, 0.0))
        diag_sq = jnp.sum(jnp.where(eye, c * c, 0.0))
        out_ref[...] += jnp.where(sublane == 1, on_diag,
                                  jnp.where(sublane == 2, diag_sq, 0.0))


def barlow_twins_loss(embeddings, lambda_param=0.005, block_t=512):
    n, d = embeddings.shape
    assert n % 2 == 0, "batch must contain an even number of embeddings"
    assert n >= 4, "need at least 2 pairs (unbiased std divides by m-1)"
    # TODO(synk): pad/mask support for feature dims that are not multiples of 128.
    assert d % 128 == 0, "feature dim must be a multiple of 128 for the tiled kernel"
    m = n // 2

    # --- hoisted column stats + normalization (single fused XLA pass) --------
    # Free metadata reshape: row i of `emb` is (z_a[i], z_b[i]).
    emb = embeddings.reshape(m, 2, d).astype(jnp.float32)
    mean = jnp.mean(emb, axis=0, keepdims=True)                       # (1, 2, d)
    centered = emb - mean
    var = jnp.sum(centered * centered, axis=0, keepdims=True) / (m - 1)  # unbiased, like torch.std(0)
    # rsqrt-multiply instead of sqrt-divide; fold the 1/m of c = z^T z / m into
    # the per-column scales (sqrt(1/m) on each side).  Values stay O(1), so the
    # bf16 cast feeding the MXU loses little precision (f32 accumulation).
    scale = lax.rsqrt(var) * (1.0 / math.sqrt(m))
    z_n = (centered * scale).astype(jnp.bfloat16)                     # (m, 2, d)
    # Free reshape: columns [0,d) are normalized z_a, columns [d,2d) are z_b.
    z_flat = z_n.reshape(m, 2 * d)

    # --- tile sizing ----------------------------------------------------------
    # Lane-dim blocks must be a multiple of 128 (or the full dim).
    t = block_t if (block_t <= d and d % block_t == 0 and block_t % 128 == 0) else d
    gj = d // t
    gk = d // t
    # TODO(synk): also tile the sample axis m for very large batches (>~8k) so a
    # single (m, T) slab never outgrows VMEM; typical Barlow Twins batches fit.

    out = pl.pallas_call(
        _bt_corr_kernel,
        out_shape=jax.ShapeDtypeStruct((gj, 8, 128), jnp.float32),
        grid_spec=pltpu.PrefetchScalarGridSpec(
            num_scalar_prefetch=0,
            grid=(gj, gk),
            in_specs=[
                # z_a column block j (constant over the inner k loop -> reused)
                pl.BlockSpec((m, t), lambda j, k: (0, j)),
                # z_b column block k (offset by gj blocks into the same array)
                pl.BlockSpec((m, t), lambda j, k: (0, gj + k)),
            ],
            # Per-j lane-dense partial-sum block, resident across k.
            out_specs=pl.BlockSpec((1, 8, 128), lambda j, k: (j, 0, 0)),
        ),
        compiler_params=pltpu.CompilerParams(
            # j: independent output rows -> shard across TensorCores (v7x).
            # k: output block is revisited/accumulated -> must stay arbitrary.
            dimension_semantics=("parallel", "arbitrary"),
            # Explicit scoped-VMEM budget (covers larger m / block_t choices on
            # v5e's 16 MiB default; well within v7x's 64 MiB physical VMEM).
            vmem_limit_bytes=32 * 1024 * 1024,
        ),
    )(z_flat, z_flat)

    # Tiny final reduction over (gj, 3) scalars in plain JAX.
    total_sq = jnp.sum(out[:, 0, 0])
    on_diag = jnp.sum(out[:, 1, 0])
    diag_sq = jnp.sum(out[:, 2, 0])
    off_diag = total_sq - diag_sq
    return on_diag + lambda_param * off_diag


def _reference_loss(embeddings, lambda_param=0.005):
    n, d = embeddings.shape
    m = n // 2
    emb = embeddings.reshape(m, 2, d).astype(jnp.float32)
    z_a = emb[:, 0, :]
    z_b = emb[:, 1, :]
    z_a = (z_a - z_a.mean(0)) / jnp.std(z_a, axis=0, ddof=1)
    z_b = (z_b - z_b.mean(0)) / jnp.std(z_b, axis=0, ddof=1)
    c = z_a.T @ z_b / m
    diag = jnp.diagonal(c)
    on_diag = jnp.sum((1.0 - diag) ** 2)
    off_diag = jnp.sum(c ** 2) - jnp.sum(diag ** 2)
    return on_diag + lambda_param * off_diag


if __name__ == "__main__":
    key = jax.random.PRNGKey(0)
    # Small but tiling-exercising shape: 8 pairs, feature dim 256 -> 2x2 grid
    # of 128-wide correlation tiles (diagonal and off-diagonal tiles + the
    # k-axis accumulation all get exercised).
    n, d = 16, 256
    embeddings = jax.random.normal(key, (n, d), dtype=jnp.float32)

    loss = barlow_twins_loss(embeddings, lambda_param=0.005, block_t=128)
    jax.block_until_ready(loss)

    ref = _reference_loss(embeddings, lambda_param=0.005)
    # bf16 MXU feed -> slightly looser tolerance than a pure-f32 comparison.
    np.testing.assert_allclose(np.asarray(loss), np.asarray(ref), rtol=2e-2, atol=1e-2)

    print("KERNEL_OK")
</pallas_src>

<mosaic_0001>
module attributes {stable_mosaic.version = 11 : i64} {
  func.func @_bt_corr_kernel(%arg0: i32, %arg1: i32, %arg2: memref<8x128xbf16, #tpu.memory_space<vmem>>, %arg3: memref<8x128xbf16, #tpu.memory_space<vmem>>, %arg4: memref<1x8x128xf32, #tpu.memory_space<vmem>>) attributes {dimension_semantics = [#tpu.dimension_semantics<parallel>, #tpu.dimension_semantics<arbitrary>], iteration_bounds = array<i64: 2, 2>, scalar_prefetch = 0 : i64, scratch_operands = 0 : i64, tpu.core_type = #tpu.core_type<tc>, window_params = [{transform_indices = @transform_0, window_bounds = array<i64: 8, 128>}, {transform_indices = @transform_1, window_bounds = array<i64: 8, 128>}, {transform_indices = @transform_2, window_bounds = array<i64: 1, 8, 128>}]} {
    %c0_i32 = arith.constant 0 : i32
    %0 = arith.cmpi eq, %arg1, %c0_i32 : i32
    %1 = arith.extui %0 : i1 to i32
    %c0_i32_0 = arith.constant 0 : i32
    %2 = arith.cmpi ne, %1, %c0_i32_0 : i32
    scf.if %2 {
      %cst_14 = arith.constant 0.000000e+00 : f32
      %23 = vector.broadcast %cst_14 : f32 to vector<1x8x128xf32>
      %c0_15 = arith.constant 0 : index
      %c0_16 = arith.constant 0 : index
      %c0_17 = arith.constant 0 : index
      %24 = vector.load %arg4[%c0_15, %c0_16, %c0_17] : memref<1x8x128xf32, #tpu.memory_space<vmem>>, vector<1x8x128xf32>
      tpu.vector_store %arg4[%c0_15, %c0_16, %c0_17], %23 {strides = array<i32>} : memref<1x8x128xf32, #tpu.memory_space<vmem>>, vector<1x8x128xf32>,
    } else {
    }
    %c0 = arith.constant 0 : index
    %c0_1 = arith.constant 0 : index
    %3 = vector.load %arg2[%c0, %c0_1] : memref<8x128xbf16, #tpu.memory_space<vmem>>, vector<8x128xbf16>
    %c0_2 = arith.constant 0 : index
    %c0_3 = arith.constant 0 : index
    %4 = vector.load %arg3[%c0_2, %c0_3] : memref<8x128xbf16, #tpu.memory_space<vmem>>, vector<8x128xbf16>
    %cst = arith.constant dense<0.000000e+00> : vector<128x128xf32>
    %5 = tpu.matmul %3, %4, %cst {dimension_numbers = #tpu.dot_dimension_numbers<[0], [0], [1], [1], [0, 1, 1, 1], [], []>} : vector<8x128xbf16>, vector<8x128xbf16>, vector<128x128xf32> -> vector<128x128xf32>
    %6 = tpu.iota {dimensions = array<i32: 1>} : vector<1x8x128xi32>
    %c0_4 = arith.constant 0 : index
    %c0_5 = arith.constant 0 : index
    %c0_6 = arith.constant 0 : index
    %7 = vector.load %arg4[%c0_4, %c0_5, %c0_6] : memref<1x8x128xf32, #tpu.memory_space<vmem>>, vector<1x8x128xf32>
    %c0_i32_7 = arith.constant 0 : i32
    %8 = vector.broadcast %c0_i32_7 : i32 to vector<1x8x128xi32>
    %9 = arith.cmpi eq, %6, %8 : vector<1x8x128xi32>
    %10 = arith.mulf %5, %5 : vector<128x128xf32>
    %11 = vector.shape_cast %10 : vector<128x128xf32> to vector<1x128x128xf32>
    %cst_8 = arith.constant dense<0.000000e+00> : vector<1xf32>
    %12 = vector.multi_reduction <add>, %11, %cst_8 [1, 2] : vector<1x128x128xf32> to vector<1xf32>
    %13 = vector.shape_cast %12 : vector<1xf32> to vector<1x1x1xf32>
    %14 = vector.extract %13[0, 0, 0] : f32 from vector<1x1x1xf32>
    %cst_9 = arith.constant 0.000000e+00 : f32
    %15 = vector.broadcast %14 : f32 to vector<1x8x128xf32>
    %16 = vector.broadcast %cst_9 : f32 to vector<1x8x128xf32>
    %17 = arith.select %9, %15, %16 : vector<1x8x128xi1>, vector<1x8x128xf32>
    %18 = arith.addf %7, %17 : vector<1x8x128xf32>
    %c0_10 = arith.constant 0 : index
    %c0_11 = arith.constant 0 : index
    %c0_12 = arith.constant 0 : index
    %19 = vector.load %arg4[%c0_10, %c0_11, %c0_12] : memref<1x8x128xf32, #tpu.memory_space<vmem>>, vector<1x8x128xf32>
    tpu.vector_store %arg4[%c0_10, %c0_11, %c0_12], %18 {strides = array<i32>} : memref<1x8x128xf32, #tpu.memory_space<vmem>>, vector<1x8x128xf32>,
    %20 = arith.cmpi eq, %arg0, %arg1 : i32
    %21 = arith.extui %20 : i1 to i32
    %c0_i32_13 = arith.constant 0 : i32
    %22 = arith.cmpi ne, %21, %c0_i32_13 : i32
    scf.if %22 {
      %23 = tpu.iota {dimensions = array<i32: 0>} : vector<128x128xi32>
      %24 = tpu.iota {dimensions = array<i32: 1>} : vector<128x128xi32>
      %25 = arith.cmpi eq, %23, %24 : vector<128x128xi32>
      %cst_14 = arith.constant 1.000000e+00 : f32
      %26 = vector.broadcast %cst_14 : f32 to vector<128x128xf32>
      %27 = arith.subf %26, %5 : vector<128x128xf32>
      %28 = arith.mulf %27, %27 : vector<128x128xf32>
      %cst_15 = arith.constant 0.000000e+00 : f32
      %29 = vector.broadcast %cst_15 : f32 to vector<128x128xf32>
      %30 = arith.select %25, %28, %29 : vector<128x128xi1>, vector<128x128xf32>
      %31 = vector.shape_cast %30 : vector<128x128xf32> to vector<1x128x128xf32>
      %cst_16 = arith.constant dense<0.000000e+00> : vector<1xf32>
      %32 = vector.multi_reduction <add>, %31, %cst_16 [1, 2] : vector<1x128x128xf32> to vector<1xf32>
      %33 = vector.shape_cast %32 : vector<1xf32> to vector<1x1x1xf32>
      %34 = vector.extract %33[0, 0, 0] : f32 from vector<1x1x1xf32>
      %35 = arith.mulf %5, %5 : vector<128x128xf32>
      %cst_17 = arith.constant 0.000000e+00 : f32
      %36 = vector.broadcast %cst_17 : f32 to vector<128x128xf32>
      %37 = arith.select %25, %35, %36 : vector<128x128xi1>, vector<128x128xf32>
      %38 = vector.shape_cast %37 : vector<128x128xf32> to vector<1x128x128xf32>
      %cst_18 = arith.constant dense<0.000000e+00> : vector<1xf32>
      %39 = vector.multi_reduction <add>, %38, %cst_18 [1, 2] : vector<1x128x128xf32> to vector<1xf32>
      %40 = vector.shape_cast %39 : vector<1xf32> to vector<1x1x1xf32>
      %41 = vector.extract %40[0, 0, 0] : f32 from vector<1x1x1xf32>
      %c0_19 = arith.constant 0 : index
      %c0_20 = arith.constant 0 : index
      %c0_21 = arith.constant 0 : index
      %42 = vector.load %arg4[%c0_19, %c0_20, %c0_21] : memref<1x8x128xf32, #tpu.memory_space<vmem>>, vector<1x8x128xf32>
      %c1_i32 = arith.constant 1 : i32
      %43 = vector.broadcast %c1_i32 : i32 to vector<1x8x128xi32>
      %44 = arith.cmpi eq, %6, %43 : vector<1x8x128xi32>
      %c2_i32 = arith.constant 2 : i32
      %45 = vector.broadcast %c2_i32 : i32 to vector<1x8x128xi32>
      %46 = arith.cmpi eq, %6, %45 : vector<1x8x128xi32>
      %cst_22 = arith.constant 0.000000e+00 : f32
      %47 = vector.broadcast %41 : f32 to vector<1x8x128xf32>
      %48 = vector.broadcast %cst_22 : f32 to vector<1x8x128xf32>
      %49 = arith.select %46, %47, %48 : vector<1x8x128xi1>, vector<1x8x128xf32>
      %50 = vector.broadcast %34 : f32 to vector<1x8x128xf32>
      %51 = arith.select %44, %50, %49 : vector<1x8x128xi1>, vector<1x8x128xf32>
      %52 = arith.addf %42, %51 : vector<1x8x128xf32>
      %c0_23 = arith.constant 0 : index
      %c0_24 = arith.constant 0 : index
      %c0_25 = arith.constant 0 : index
      %53 = vector.load %arg4[%c0_23, %c0_24, %c0_25] : memref<1x8x128xf32, #tpu.memory_space<vmem>>, vector<1x8x128xf32>
      tpu.vector_store %arg4[%c0_23, %c0_24, %c0_25], %52 {strides = array<i32>} : memref<1x8x128xf32, #tpu.memory_space<vmem>>, vector<1x8x128xf32>,
    } else {
    }
    return
  }
  func.func @transform_0(%arg0: i32, %arg1: i32) -> (i32, i32) {
    %c0_i32 = arith.constant 0 : i32
    %c0_i32_0 = arith.constant 0 : i32
    return %c0_i32, %arg0 : i32, i32
  }
  func.func @transform_1(%arg0: i32, %arg1: i32) -> (i32, i32) {
    %c2_i32 = arith.constant 2 : i32
    %0 = arith.addi %c2_i32, %arg1 : i32
    %c0_i32 = arith.constant 0 : i32
    %c0_i32_0 = arith.constant 0 : i32
    return %c0_i32, %0 : i32, i32
  }
  func.func @transform_2(%arg0: i32, %arg1: i32) -> (i32, i32, i32) {
    %c0_i32 = arith.constant 0 : i32
    %c0_i32_0 = arith.constant 0 : i32
    %c0_i32_1 = arith.constant 0 : i32
    return %arg0, %c0_i32, %c0_i32_0 : i32, i32, i32
  }
}

</mosaic_0001>

<llo_original>
// kernel: tpu_custom_call.1
$region0: #{tpu_custom_call.1}
  #allocation0 [shape = 'u32[]', space=smem, size = 0x4, offset = 0x4, fixed_abs, tag = 'smem constant byte address 0x4 - core index']
  #allocation1 [shape = 'u32[144,128]{1,0:T(1,128)}', space=vmem, size = 0x12000, scoped, tag = 'internal scratch']
  %s0 = inlined_call_operand.hbm [shape: bf16[8,512], index: 0, kind: input, shape index: {}]
  %s1 = inlined_call_operand.hbm [shape: bf16[8,512], index: 1, kind: input, shape index: {}]
  %s2 = inlined_call_operand.hbm [shape: f32[2,8,128], index: 2, kind: output, shape index: {}]
  %s3 = sld [smem:[#allocation0]]
  $region57: #{tpu_custom_call.1} parent=0
    _
  %s5 = ssub.s32 1, %s3
  %s6 = scalar_select 0, %s5, %s3
  $region1: #{tpu_custom_call.1} parent=0
    #allocation2 [shape = 'u8[4096]{0}', space=vmem, size = 0x1000, scoped, tag = 'input window, operand 0']
    #allocation3 [shape = 's32[2]{0}', space=sflag, size = 0x8, scoped, tag = 'scoped memory for tpu_custom_call.1']
    #allocation4 [shape = 's32[2]{0}', space=sflag, size = 0x8, scoped, tag = 'scoped memory for tpu_custom_call.1']
    #allocation5 [shape = 'u8[4096]{0}', space=vmem, size = 0x1000, scoped, tag = 'input window, operand 1']
    #allocation6 [shape = 's32[2]{0}', space=sflag, size = 0x8, scoped, tag = 'scoped memory for tpu_custom_call.1']
    #allocation7 [shape = 'u8[8192]{0}', space=vmem, size = 0x2000, scoped, tag = 'output window, operand 0']
    %7 = vsyncpa [#allocation3], 0
    %s8 = scalar_lea.sflag [#allocation3], 1
    %9 = vsyncpa %s8, 0
    %10 = vsyncpa [#allocation6], 0
    %s11 = scalar_lea.sflag [#allocation6], 1
    %12 = vsyncpa %s11, 0
    %13 = vsyncpa [#allocation4], 0
    %s14 = scalar_lea.sflag [#allocation4], 1
    %15 = vsyncpa %s14, 0
    loop: start=0, step=1, limit=6
    $region2: #{tpu_custom_call.1} parent=1 // loop_pre_header
      _
    $region3: #{tpu_custom_call.1} parent=1 // loop_header
      %s17 = sphi 0, %s21
      %p18 = scmp.ge.s32.totalorder %s17, 6
      %s24 = sphi 0, %s36
      %s25 = sphi 0, %s32
      %s26 = sphi 0, %s24
      %s27 = sphi 0, %s25
      %s28 = sphi 0, %s26
      %s29 = sphi 0, %s27
      %s39 = sphi 0, %s41
      %s42 = sphi 0, %s39
      %s43 = sphi 0, %s42
      %s59 = sphi 0, %s43
      %s67 = sphi 0, %s69
      %s70 = sphi 0, %s67
      %s71 = sphi 0, %s70
      %s87 = sphi 0, %s71
      %s93 = sphi 0, %s95
      %s96 = sphi 0, %s93
      %s97 = sphi 0, %s96
      %s113 = sphi 0, %s97
    $region4: #{tpu_custom_call.1} parent=1 // loop_header_branch
      %20 = sbr.rel (%p18) target = $region8
    $region5: #{tpu_custom_call.1} parent=1 // loop_body
      %s22 = ssub.s32 %s17, 1
      %s23 = ssub.s32 %s17, 2
      %s30 = sadd.s32 1, %s25
      %p31 = scmp.ge.s32.totalorder %s30, 2
      %s32 = scalar_select %p31, 0, %s30
      %s33 = sadd.s32 1, %s24
      %s34 = scalar_select %p31, %s33, %s24
      %p35 = scmp.ge.s32.totalorder %s34, 2
      %s36 = scalar_select %p35, 0, %s34
      %s37 = ssub.s32 %s24, %s36
      %p38 = scmp.eq.s32.totalorder %s37, 0
      %s40 = sadd.s32 %s39, 1
      %s41 = scalar_select %p38, %s39, %s40
      %p44 = pneg %p38
      %p45 = scmp.eq.s32.totalorder %s17, 3
      %p46 = por %p44, %p45
      %p47 = scmp.ne.s32.totalorder %s39, %s42
      %p48 = scmp.eq.s32.totalorder %s17, 0
      %p49 = por %p47, %p48
      %p50 = scmp.ne.s32.totalorder %s39, %s42
      %p51 = scmp.eq.s32.totalorder %s22, 3
      %p52 = por %p50, %p51
      %p53 = scmp.ne.s32.totalorder %s42, %s43
      %p54 = scmp.eq.s32.totalorder %s22, 0
      %p55 = por %p53, %p54
      %p56 = scmp.ne.s32.totalorder %s42, %s43
      %p57 = scmp.eq.s32.totalorder %s23, 3
      %p58 = por %p56, %p57
      %p60 = scmp.ne.s32.totalorder %s43, %s59
      %p61 = scmp.eq.s32.totalorder %s23, 0
      %p62 = por %p60, %p61
      %s63 = sadd.s32 %s25, 2
      %s64 = sadd.s32 %s32, 2
      %s65 = ssub.s32 %s63, %s64
      %p66 = scmp.eq.s32.totalorder %s65, 0
      %s68 = sadd.s32 %s67, 1
      %s69 = scalar_select %p66, %s67, %s68
      %p72 = pneg %p66
      %p73 = scmp.eq.s32.totalorder %s17, 3
      %p74 = por %p72, %p73
      %p75 = scmp.ne.s32.totalorder %s67, %s70
      %p76 = scmp.eq.s32.totalorder %s17, 0
      %p77 = por %p75, %p76
      %p78 = scmp.ne.s32.totalorder %s67, %s70
      %p79 = scmp.eq.s32.totalorder %s22, 3
      %p80 = por %p78, %p79
      %p81 = scmp.ne.s32.totalorder %s70, %s71
      %p82 = scmp.eq.s32.totalorder %s22, 0
      %p83 = por %p81, %p82
      %p84 = scmp.ne.s32.totalorder %s70, %s71
      %p85 = scmp.eq.s32.totalorder %s23, 3
      %p86 = por %p84, %p85
      %p88 = scmp.ne.s32.totalorder %s71, %s87
      %p89 = scmp.eq.s32.totalorder %s23, 0
      %p90 = por %p88, %p89
      %s91 = ssub.s32 %s24, %s36
      %p92 = scmp.eq.s32.totalorder %s91, 0
      %s94 = sadd.s32 %s93, 1
      %s95 = scalar_select %p92, %s93, %s94
      %p98 = pneg %p92
      %p99 = scmp.eq.s32.totalorder %s17, 3
      %p100 = por %p98, %p99
      %p101 = scmp.ne.s32.totalorder %s93, %s96
      %p102 = scmp.eq.s32.totalorder %s17, 0
      %p103 = por %p101, %p102
      %p104 = scmp.ne.s32.totalorder %s93, %s96
      %p105 = scmp.eq.s32.totalorder %s22, 3
      %p106 = por %p104, %p105
      %p107 = scmp.ne.s32.totalorder %s96, %s97
      %p108 = scmp.eq.s32.totalorder %s22, 0
      %p109 = por %p107, %p108
      %p110 = scmp.ne.s32.totalorder %s96, %s97
      %p111 = scmp.eq.s32.totalorder %s23, 3
      %p112 = por %p110, %p111
      %p114 = scmp.ne.s32.totalorder %s97, %s113
      %p115 = scmp.eq.s32.totalorder %s23, 0
      %p116 = por %p114, %p115
      %p117 = scmp.le.s32.totalorder 1, %s17
      %p118 = scmp.lt.s32.totalorder %s17, 5
      %p119 = pnand %p117, %p118
      %p120 = pneg %p119
      // Predicated region
      $region9: #{tpu_custom_call.1} parent=5 // pred_check
        _
      $region10: #{tpu_custom_call.1} parent=5 // pred_check_branch
        %122 = sbr.rel (%p119) target = $region12
      $region11: #{tpu_custom_call.1} parent=5 // pred_region
        %s123 = ssub.s32 %s17, 1
      $region12: #{tpu_custom_call.1} parent=5 // pred_fallthru
        _
      %p124 = scmp.lt.s32.totalorder %s17, 4
      // Predicated region
      $region13: #{tpu_custom_call.1} parent=5 // pred_check
        %p125 = pneg %p124
      $region14: #{tpu_custom_call.1} parent=5 // pred_check_branch
        %127 = sbr.rel (%p125) target = $region16
      $region15: #{tpu_custom_call.1} parent=5 // pred_region
        // Predicated region
        $region17: #{tpu_custom_call.1} parent=15 // pred_check
          %p128 = pneg %p49
        $region18: #{tpu_custom_call.1} parent=15 // pred_check_branch
          %130 = sbr.rel (%p128) target = $region20
        $region19: #{tpu_custom_call.1} parent=15 // pred_region
          %s131 = sand.u32 %s39, 1
          %s132 = scalar_lea.sflag [#allocation3], %s131
          %s133 = sand.u32 %s39, 1
          %s134 = smul.addr %s133, 4
          %s135 = scalar_lea.vmem [#allocation2], %s134
          %s137 = ssub.s32 64, 64
          %138 = vsyncadd %s132, %s137
          %s139 = smul.addr %s24, 64
          %s140 = scalar_lea.hbm %s0, %s139
          %s142 = sshll.u32 %s135, 4
          %s143 = int_to_ptr.vmem [resolvable:$true] %s142
          %145 = dma.hbm_to_vmem [thread:$0]  %s140, 64, %s143, %s132
        $region20: #{tpu_custom_call.1} parent=15 // pred_fallthru
          _
        // Predicated region
        $region21: #{tpu_custom_call.1} parent=15 // pred_check
          %p146 = pneg %p77
        $region22: #{tpu_custom_call.1} parent=15 // pred_check_branch
          %148 = sbr.rel (%p146) target = $region24
        $region23: #{tpu_custom_call.1} parent=15 // pred_region
          %s149 = sand.u32 %s67, 1
          %s150 = scalar_lea.sflag [#allocation6], %s149
          %s151 = sand.u32 %s67, 1
          %s152 = smul.addr %s151, 4
          %s153 = scalar_lea.vmem [#allocation5], %s152
          %s154 = sadd.s32 %s25, 2
          %s156 = ssub.s32 64, 64
          %157 = vsyncadd %s150, %s156
          %s158 = smul.addr %s154, 64
          %s159 = scalar_lea.hbm %s1, %s158
          %s161 = sshll.u32 %s153, 4
          %s162 = int_to_ptr.vmem [resolvable:$true] %s161
          %164 = dma.hbm_to_vmem [thread:$0]  %s159, 64, %s162, %s150
        $region24: #{tpu_custom_call.1} parent=15 // pred_fallthru
          _
      $region16: #{tpu_custom_call.1} parent=5 // pred_fallthru
        _
      %p165 = scmp.le.s32.totalorder 1, %s17
      %p166 = scmp.lt.s32.totalorder %s17, 5
      %p167 = pnand %p165, %p166
      %p168 = pneg %p167
      // Predicated region
      $region25: #{tpu_custom_call.1} parent=5 // pred_check
        _
      $region26: #{tpu_custom_call.1} parent=5 // pred_check_branch
        %170 = sbr.rel (%p167) target = $region28
      $region27: #{tpu_custom_call.1} parent=5 // pred_region
        %s171 = ssub.s32 %s17, 1
        %s172 = sand.u32 %s42, 1
        %s173 = scalar_lea.sflag [#allocation3], %s172
        %s174 = sand.u32 %s42, 1
        %s175 = smul.addr %s174, 4
        %s176 = scalar_lea.vmem [#allocation2], %s175
        // Predicated region
        $region29: #{tpu_custom_call.1} parent=27 // pred_check
          %p177 = pneg %p55
        $region30: #{tpu_custom_call.1} parent=27 // pred_check_branch
          %179 = sbr.rel (%p177) target = $region32
        $region31: #{tpu_custom_call.1} parent=27 // pred_region
          %180 = dma.done %s173, 64
        $region32: #{tpu_custom_call.1} parent=27 // pred_fallthru
          _
        %s181 = sand.u32 %s70, 1
        %s182 = scalar_lea.sflag [#allocation6], %s181
        %s183 = sand.u32 %s70, 1
        %s184 = smul.addr %s183, 4
        %s185 = scalar_lea.vmem [#allocation5], %s184
        // Predicated region
        $region33: #{tpu_custom_call.1} parent=27 // pred_check
          %p186 = pneg %p83
        $region34: #{tpu_custom_call.1} parent=27 // pred_check_branch
          %188 = sbr.rel (%p186) target = $region36
        $region35: #{tpu_custom_call.1} parent=27 // pred_region
          %189 = dma.done %s182, 64
        $region36: #{tpu_custom_call.1} parent=27 // pred_fallthru
          _
        %s190 = sand.u32 %s42, 1
        %s191 = scalar_lea.sflag [#allocation3], %s190
        %s192 = sand.u32 %s42, 1
        %s193 = smul.addr %s192, 4
        %s194 = scalar_lea.vmem [#allocation2], %s193
        %p195 = pneg %p55
        %p196 = pneg %p52
        %s197 = sand.u32 %s70, 1
        %s198 = scalar_lea.sflag [#allocation6], %s197
        %s199 = sand.u32 %s70, 1
        %s200 = smul.addr %s199, 4
        %s201 = scalar_lea.vmem [#allocation5], %s200
        %p202 = pneg %p83
        %p203 = pneg %p80
        %p204 = pneg %p109
        %p205 = pneg %p106
        %s206 = sand.u32 %s96, 1
        %s207 = scalar_lea.sflag [#allocation4], %s206
        %s208 = sand.u32 %s96, 1
        %s209 = smul.addr %s208, 8
        %s210 = scalar_lea.vmem [#allocation7], %s209
        %s211 = sadd.s32 %s27, 2
        %p213 = scmp.eq.s32.totalorder %s27, 0
        // Predicated region
        $region37: #{tpu_custom_call.1} parent=27 // pred_check
          %p214 = pneg %p213
        $region38: #{tpu_custom_call.1} parent=27 // pred_check_branch
          %216 = sbr.rel (%p214) target = $region40
        $region39: #{tpu_custom_call.1} parent=27 // pred_region
          %217 = vst [vmem:[%s210] sm:$0xff] 0.0
        $region40: #{tpu_custom_call.1} parent=27 // pred_fallthru
          _
        %v218 = vld [vmem:[%s176] sm:$0xf]
        %v219 = vld [vmem:[%s185] sm:$0xf]
        %220 = vxpose.xlu0.c.b16.start [1/8] %v218, 128
        %221 = vxpose.xlu0.c.b16.cont [2/8] 0, 128
        %222 = vxpose.xlu0.c.b16.cont [3/8] 0, 128
        %223 = vxpose.xlu0.c.b16.cont [4/8] 0, 128
        %224 = vxpose.xlu0.c.b16.cont [5/8] 0, 128
        %225 = vxpose.xlu0.c.b16.cont [6/8] 0, 128
        %226 = vxpose.xlu0.c.b16.cont [7/8] 0, 128
        %227 = vxpose.xlu0.c.b16.end [8/8] 0, 128
        %v228 = vpop.trf.xlu0
        %v229 = vpop.trf.xlu0
        %v230 = vpop.trf.xlu0
        %v231 = vpop.trf.xlu0
        %v232 = vpop.trf.xlu0
        %v233 = vpop.trf.xlu0
        %v234 = vpop.trf.xlu0
        %v235 = vpop.trf.xlu0
        %vm236 = vcmask 64512
        %v238 = vsel %vm236, %v228, 0
        %v241 = vsel %vm236, %v229, 0
        %v244 = vsel %vm236, %v230, 0
        %v247 = vsel %vm236, %v231, 0
        %v250 = vsel %vm236, %v232, 0
        %v253 = vsel %vm236, %v233, 0
        %v256 = vsel %vm236, %v234, 0
        %v259 = vsel %vm236, %v235, 0
        %vm261 = vcmask 1043456
        %v263 = vsel %vm261, %v219, 0
        %265 = vmatprep.subr.bf16.mxu0 0
        %266 = vmatpush1.bf16.msra.mxu0 %v263
        %267 = vmatprep.subr.bf16.mxu0 0
        %268 = vmatpush1.bf16.msra.mxu0 0
        %269 = vmatprep.subr.bf16.mxu0 0
        %270 = vmatpush1.bf16.msra.mxu0 0
        %271 = vmatprep.subr.bf16.mxu0 0
        %272 = vmatpush1.bf16.msra.mxu0 0
        %273 = vmatprep.subr.bf16.mxu0 0
        %274 = vmatpush1.bf16.msra.mxu0 0
        %275 = vmatprep.subr.bf16.mxu0 0
        %276 = vmatpush1.bf16.msra.mxu0 0
        %277 = vmatprep.subr.bf16.mxu0 0
        %278 = vmatpush1.bf16.msra.mxu0 0
        %279 = vmatprep.subr.bf16.mxu0 0
        %280 = vmatpush1.bf16.msra.mxu0 0
        %281 = vmatprep.subr.bf16.mxu0 0
        %282 = vmatpush1.bf16.msra.mxu0 0
        %283 = vmatprep.subr.bf16.mxu0 0
        %284 = vmatpush1.bf16.msra.mxu0 0
        %285 = vmatprep.subr.bf16.mxu0 0
        %286 = vmatpush1.bf16.msra.mxu0 0
        %287 = vmatprep.subr.bf16.mxu0 0
        %288 = vmatpush1.bf16.msra.mxu0 0
        %289 = vmatprep.subr.bf16.mxu0 0
        %290 = vmatpush1.bf16.msra.mxu0 0
        %291 = vmatprep.subr.bf16.mxu0 0
        %292 = vmatpush1.bf16.msra.mxu0 0
        %293 = vmatprep.subr.bf16.mxu0 0
        %294 = vmatpush1.bf16.msra.mxu0 0
        %295 = vmatprep.subr.bf16.mxu0 0
        %296 = vmatpush1.bf16.msra.mxu0 0
        %297 = vmatprep.mubr.bf16.mxu0 0
        %298 = vmatmul.mubr.bf16.gmra.mrb[0].mxu0 %v238
        %v299 = vpop.f32.mrb[0].mxu0
        %v300 = vadd.f32 0.0, %v299
        %v301 = vpop.f32.mrb[0].mxu0
        %v302 = vpop.f32.mrb[0].mxu0
        %v303 = vadd.f32 0.0, %v302
        %v304 = vpop.f32.mrb[0].mxu0
        %305 = vmatprep.mubr.bf16.mxu0 0
        %306 = vmatmul.mubr.bf16.gmra.mrb[0].mxu0 %v241
        %v307 = vpop.f32.mrb[0].mxu0
        %v308 = vadd.f32 0.0, %v307
        %v309 = vpop.f32.mrb[0].mxu0
        %v310 = vpop.f32.mrb[0].mxu0
        %v311 = vadd.f32 0.0, %v310
        %v312 = vpop.f32.mrb[0].mxu0
        %313 = vmatprep.mubr.bf16.mxu0 0
        %314 = vmatmul.mubr.bf16.gmra.mrb[0].mxu0 %v244
        %v315 = vpop.f32.mrb[0].mxu0
        %v316 = vadd.f32 0.0, %v315
        %v317 = vpop.f32.mrb[0].mxu0
        %v318 = vpop.f32.mrb[0].mxu0
        %v319 = vadd.f32 0.0, %v318
        %v320 = vpop.f32.mrb[0].mxu0
        %321 = vmatprep.mubr.bf16.mxu0 0
        %322 = vmatmul.mubr.bf16.gmra.mrb[0].mxu0 %v247
        %v323 = vpop.f32.mrb[0].mxu0
        %v324 = vadd.f32 0.0, %v323
        %v325 = vpop.f32.mrb[0].mxu0
        %v326 = vpop.f32.mrb[0].mxu0
        %v327 = vadd.f32 0.0, %v326
        %v328 = vpop.f32.mrb[0].mxu0
        %329 = vmatprep.mubr.bf16.mxu0 0
        %330 = vmatmul.mubr.bf16.gmra.mrb[0].mxu0 %v250
        %v331 = vpop.f32.mrb[0].mxu0
        %v332 = vadd.f32 0.0, %v331
        %v333 = vpop.f32.mrb[0].mxu0
        %v334 = vpop.f32.mrb[0].mxu0
        %v335 = vadd.f32 0.0, %v334
        %v336 = vpop.f32.mrb[0].mxu0
        %337 = vmatprep.mubr.bf16.mxu0 0
        %338 = vmatmul.mubr.bf16.gmra.mrb[0].mxu0 %v253
        %v339 = vpop.f32.mrb[0].mxu0
        %v340 = vadd.f32 0.0, %v339
        %v341 = vpop.f32.mrb[0].mxu0
        %v342 = vpop.f32.mrb[0].mxu0
        %v343 = vadd.f32 0.0, %v342
        %v344 = vpop.f32.mrb[0].mxu0
        %345 = vmatprep.mubr.bf16.mxu0 0
        %346 = vmatmul.mubr.bf16.gmra.mrb[0].mxu0 %v256
        %v347 = vpop.f32.mrb[0].mxu0
        %v348 = vadd.f32 0.0, %v347
        %v349 = vpop.f32.mrb[0].mxu0
        %v350 = vpop.f32.mrb[0].mxu0
        %v351 = vadd.f32 0.0, %v350
        %v352 = vpop.f32.mrb[0].mxu0
        %353 = vmatprep.mubr.bf16.mxu0 0
        %354 = vmatmul.mubr.bf16.gmra.mrb[0].mxu0 %v259
        %v355 = vpop.f32.mrb[0].mxu0
        %v356 = vadd.f32 0.0, %v355
        %v357 = vpop.f32.mrb[0].mxu0
        %v358 = vpop.f32.mrb[0].mxu0
        %v359 = vadd.f32 0.0, %v358
        %v360 = vpop.f32.mrb[0].mxu0
        %361 = vdwg.mxu0
        %v362 = vlaneseq
        %v363 = vshrl.u32 %v362, 7
        %v364 = vld [vmem:[%s210] sm:$0xff]
        %vm365 = vcmp.eq.s32.totalorder %v363, 0
        %v366 = vmul.f32 %v300, %v300
        %v367 = vmul.f32 %v303, %v303
        %v368 = vmul.f32 %v308, %v308
        %v369 = vmul.f32 %v311, %v311
        %v370 = vmul.f32 %v316, %v316
        %v371 = vmul.f32 %v319, %v319
        %v372 = vmul.f32 %v324, %v324
        %v373 = vmul.f32 %v327, %v327
        %v374 = vmul.f32 %v332, %v332
        %v375 = vmul.f32 %v335, %v335
        %v376 = vmul.f32 %v340, %v340
        %v377 = vmul.f32 %v343, %v343
        %v378 = vmul.f32 %v348, %v348
        %v379 = vmul.f32 %v351, %v351
        %v380 = vmul.f32 %v356, %v356
        %v381 = vmul.f32 %v359, %v359
        %v382 = vadd.f32 %v366, %v367
        %v383 = vadd.f32 %v382, %v368
        %v384 = vadd.f32 %v383, %v369
        %v385 = vadd.f32 %v384, %v370
        %v386 = vadd.f32 %v385, %v371
        %v387 = vadd.f32 %v386, %v372
        %v388 = vadd.f32 %v387, %v373
        %v389 = vadd.f32 %v388, %v374
        %v390 = vadd.f32 %v389, %v375
        %v391 = vadd.f32 %v390, %v376
        %v392 = vadd.f32 %v391, %v377
        %v393 = vadd.f32 %v392, %v378
        %v394 = vadd.f32 %v393, %v379
        %v395 = vadd.f32 %v394, %v380
        %v396 = vadd.f32 %v395, %v381
        %397 = vadd.xlane.f32.xlu0 %v396
        %v398 = vpop.xlane.xlu0 %397
        %v399 = vrot.slane %v398, 4
        %v400 = vadd.f32 %v398, %v399
        %v401 = vrot.slane %v400, 2
        %v402 = vadd.f32 %v400, %v401
        %v403 = vrot.slane %v402, 1
        %v404 = vadd.f32 %v402, %v403
        %s405 = vtos %v404
        %v406 = vstv %s405
        %v407 = vsel %vm365, %v406, 0.0
        %v408 = vadd.f32 %v364, %v407
        %409 = vst [vmem:[%s210] sm:$0xff] %v408
        %p410 = scmp.eq.s32.totalorder %s26, %s27
        // Predicated region
        $region41: #{tpu_custom_call.1} parent=27 // pred_check
          %p411 = pneg %p410
        $region42: #{tpu_custom_call.1} parent=27 // pred_check_branch
          %413 = sbr.rel (%p411) target = $region44
        $region43: #{tpu_custom_call.1} parent=27 // pred_region
          %v414 = vadd.s32 %v363, 8
          %v415 = vadd.s32 %v363, 16
          %v416 = vadd.s32 %v363, 24
          %v417 = vadd.s32 %v363, 32
          %v418 = vadd.s32 %v363, 40
          %v419 = vadd.s32 %v363, 48
          %v420 = vadd.s32 %v363, 56
          %v421 = vadd.s32 %v363, 64
          %v422 = vadd.s32 %v363, 72
          %v423 = vadd.s32 %v363, 80
          %v424 = vadd.s32 %v363, 88
          %v425 = vadd.s32 %v363, 96
          %v426 = vadd.s32 %v363, 104
          %v427 = vadd.s32 %v363, 112
          %v428 = vadd.s32 %v363, 120
          %v429 = vlaneseq
          %v430 = vand.u32 %v429, 127
          %vm431 = vcmp.eq.s32.totalorder %v363, %v430
          %vm432 = vcmp.eq.s32.totalorder %v414, %v430
          %vm433 = vcmp.eq.s32.totalorder %v415, %v430
          %vm434 = vcmp.eq.s32.totalorder %v416, %v430
          %vm435 = vcmp.eq.s32.totalorder %v417, %v430
          %vm436 = vcmp.eq.s32.totalorder %v418, %v430
          %vm437 = vcmp.eq.s32.totalorder %v419, %v430
          %vm438 = vcmp.eq.s32.totalorder %v420, %v430
          %vm439 = vcmp.eq.s32.totalorder %v421, %v430
          %vm440 = vcmp.eq.s32.totalorder %v422, %v430
          %vm441 = vcmp.eq.s32.totalorder %v423, %v430
          %vm442 = vcmp.eq.s32.totalorder %v424, %v430
          %vm443 = vcmp.eq.s32.totalorder %v425, %v430
          %vm444 = vcmp.eq.s32.totalorder %v426, %v430
          %vm445 = vcmp.eq.s32.totalorder %v427, %v430
          %vm446 = vcmp.eq.s32.totalorder %v428, %v430
          %v447 = vsub.f32 1.0, %v300
          %v448 = vsub.f32 1.0, %v303
          %v449 = vsub.f32 1.0, %v308
          %v450 = vsub.f32 1.0, %v311
          %v451 = vsub.f32 1.0, %v316
          %v452 = vsub.f32 1.0, %v319
          %v453 = vsub.f32 1.0, %v324
          %v454 = vsub.f32 1.0, %v327
          %v455 = vsub.f32 1.0, %v332
          %v456 = vsub.f32 1.0, %v335
          %v457 = vsub.f32 1.0, %v340
          %v458 = vsub.f32 1.0, %v343
          %v459 = vsub.f32 1.0, %v348
          %v460 = vsub.f32 1.0, %v351
          %v461 = vsub.f32 1.0, %v356
          %v462 = vsub.f32 1.0, %v359
          %v463 = vmul.f32 %v447, %v447
          %v464 = vmul.f32 %v448, %v448
          %v465 = vmul.f32 %v449, %v449
          %v466 = vmul.f32 %v450, %v450
          %v467 = vmul.f32 %v451, %v451
          %v468 = vmul.f32 %v452, %v452
          %v469 = vmul.f32 %v453, %v453
          %v470 = vmul.f32 %v454, %v454
          %v471 = vmul.f32 %v455, %v455
          %v472 = vmul.f32 %v456, %v456
          %v473 = vmul.f32 %v457, %v457
          %v474 = vmul.f32 %v458, %v458
          %v475 = vmul.f32 %v459, %v459
          %v476 = vmul.f32 %v460, %v460
          %v477 = vmul.f32 %v461, %v461
          %v478 = vmul.f32 %v462, %v462
          %v479 = vsel %vm431, %v463, 0.0
          %v480 = vsel %vm432, %v464, 0.0
          %v481 = vsel %vm433, %v465, 0.0
          %v482 = vsel %vm434, %v466, 0.0
          %v483 = vsel %vm435, %v467, 0.0
          %v484 = vsel %vm436, %v468, 0.0
          %v485 = vsel %vm437, %v469, 0.0
          %v486 = vsel %vm438, %v470, 0.0
          %v487 = vsel %vm439, %v471, 0.0
          %v488 = vsel %vm440, %v472, 0.0
          %v489 = vsel %vm441, %v473, 0.0
          %v490 = vsel %vm442, %v474, 0.0
          %v491 = vsel %vm443, %v475, 0.0
          %v492 = vsel %vm444, %v476, 0.0
          %v493 = vsel %vm445, %v477, 0.0
          %v494 = vsel %vm446, %v478, 0.0
          %v495 = vadd.f32 %v479, %v480
          %v496 = vadd.f32 %v495, %v481
          %v497 = vadd.f32 %v496, %v482
          %v498 = vadd.f32 %v497, %v483
          %v499 = vadd.f32 %v498, %v484
          %v500 = vadd.f32 %v499, %v485
          %v501 = vadd.f32 %v500, %v486
          %v502 = vadd.f32 %v501, %v487
          %v503 = vadd.f32 %v502, %v488
          %v504 = vadd.f32 %v503, %v489
          %v505 = vadd.f32 %v504, %v490
          %v506 = vadd.f32 %v505, %v491
          %v507 = vadd.f32 %v506, %v492
          %v508 = vadd.f32 %v507, %v493
          %v509 = vadd.f32 %v508, %v494
          %510 = vadd.xlane.f32.xlu0 %v509
          %v511 = vpop.xlane.xlu0 %510
          %v512 = vrot.slane %v511, 4
          %v513 = vadd.f32 %v511, %v512
          %v514 = vrot.slane %v513, 2
          %v515 = vadd.f32 %v513, %v514
          %v516 = vrot.slane %v515, 1
          %v517 = vadd.f32 %v515, %v516
          %s518 = vtos %v517
          %v519 = vsel %vm431, %v366, 0.0
          %v520 = vsel %vm432, %v367, 0.0
          %v521 = vsel %vm433, %v368, 0.0
          %v522 = vsel %vm434, %v369, 0.0
          %v523 = vsel %vm435, %v370, 0.0
          %v524 = vsel %vm436, %v371, 0.0
          %v525 = vsel %vm437, %v372, 0.0
          %v526 = vsel %vm438, %v373, 0.0
          %v527 = vsel %vm439, %v374, 0.0
          %v528 = vsel %vm440, %v375, 0.0
          %v529 = vsel %vm441, %v376, 0.0
          %v530 = vsel %vm442, %v377, 0.0
          %v531 = vsel %vm443, %v378, 0.0
          %v532 = vsel %vm444, %v379, 0.0
          %v533 = vsel %vm445, %v380, 0.0
          %v534 = vsel %vm446, %v381, 0.0
          %v535 = vadd.f32 %v519, %v520
          %v536 = vadd.f32 %v535, %v521
          %v537 = vadd.f32 %v536, %v522
          %v538 = vadd.f32 %v537, %v523
          %v539 = vadd.f32 %v538, %v524
          %v540 = vadd.f32 %v539, %v525
          %v541 = vadd.f32 %v540, %v526
          %v542 = vadd.f32 %v541, %v527
          %v543 = vadd.f32 %v542, %v528
          %v544 = vadd.f32 %v543, %v529
          %v545 = vadd.f32 %v544, %v530
          %v546 = vadd.f32 %v545, %v531
          %v547 = vadd.f32 %v546, %v532
          %v548 = vadd.f32 %v547, %v533
          %v549 = vadd.f32 %v548, %v534
          %550 = vadd.xlane.f32.xlu0 %v549
          %v551 = vpop.xlane.xlu0 %550
          %v552 = vrot.slane %v551, 4
          %v553 = vadd.f32 %v551, %v552
          %v554 = vrot.slane %v553, 2
          %v555 = vadd.f32 %v553, %v554
          %v556 = vrot.slane %v555, 1
          %v557 = vadd.f32 %v555, %v556
          %s558 = vtos %v557
          %v559 = vld [vmem:[%s210] sm:$0xff]
          %vm560 = vcmp.eq.s32.totalorder %v363, 1
          %vm561 = vcmp.eq.s32.totalorder %v363, 2
          %v562 = vstv %s558
          %v563 = vsel %vm561, %v562, 0.0
          %v564 = vstv %s518
          %v565 = vsel %vm560, %v564, %v563
          %v566 = vadd.f32 %v559, %v565
          %567 = vst [vmem:[%s210] sm:$0xff] %v566
        $region44: #{tpu_custom_call.1} parent=27 // pred_fallthru
          _
        %s568 = sand.u32 %s96, 1
        %s569 = scalar_lea.sflag [#allocation4], %s568
        %s570 = sand.u32 %s96, 1
        %s571 = smul.addr %s570, 8
        %s572 = scalar_lea.vmem [#allocation7], %s571
        // Predicated region
        $region45: #{tpu_custom_call.1} parent=27 // pred_check
          %p573 = pneg %p106
        $region46: #{tpu_custom_call.1} parent=27 // pred_check_branch
          %575 = sbr.rel (%p573) target = $region48
        $region47: #{tpu_custom_call.1} parent=27 // pred_region
          %s577 = ssub.s32 128, 128
          %578 = vsyncadd %s569, %s577
          %s579 = smul.addr %s26, 128
          %s580 = scalar_lea.hbm %s2, %s579
          %s582 = sshll.u32 %s572, 4
          %s583 = int_to_ptr.vmem [resolvable:$true] %s582
          %585 = dma.vmem_to_hbm [thread:$0]  %s583, 128, %s580, %s569
        $region48: #{tpu_custom_call.1} parent=27 // pred_fallthru
          _
      $region28: #{tpu_custom_call.1} parent=5 // pred_fallthru
        _
      %p586 = scmp.le.s32.totalorder 2, %s17
      // Predicated region
      $region49: #{tpu_custom_call.1} parent=5 // pred_check
        %p587 = pneg %p586
      $region50: #{tpu_custom_call.1} parent=5 // pred_check_branch
        %589 = sbr.rel (%p587) target = $region52
      $region51: #{tpu_custom_call.1} parent=5 // pred_region
        %s590 = ssub.s32 %s17, 2
        // Predicated region
        $region53: #{tpu_custom_call.1} parent=51 // pred_check
          %p591 = pneg %p112
        $region54: #{tpu_custom_call.1} parent=51 // pred_check_branch
          %593 = sbr.rel (%p591) target = $region56
        $region55: #{tpu_custom_call.1} parent=51 // pred_region
          %s594 = sand.u32 %s97, 1
          %s595 = scalar_lea.sflag [#allocation4], %s594
          %s596 = sand.u32 %s97, 1
          %s597 = smul.addr %s596, 8
          %s598 = scalar_lea.vmem [#allocation7], %s597
          %599 = dma.done %s595, 128
        $region56: #{tpu_custom_call.1} parent=51 // pred_fallthru
          _
      $region52: #{tpu_custom_call.1} parent=5 // pred_fallthru
        _
    $region6: #{tpu_custom_call.1} parent=1 // loop_footer
      %s21 = sadd.s32 1, %s17
    $region7: #{tpu_custom_call.1} parent=1 // loop_footer_branch
      %16 = sbr.rel target = $region3
    $region8: #{tpu_custom_call.1} parent=1 // loop_exit
      _
    %600 = vsyncpa [#allocation3], 1
    %s601 = scalar_lea.sflag [#allocation3], 1
    %602 = vsyncpa %s601, 1
    %603 = vsyncpa [#allocation6], 1
    %s604 = scalar_lea.sflag [#allocation6], 1
    %605 = vsyncpa %s604, 1
    %606 = vsyncpa [#allocation4], 1
    %s607 = scalar_lea.sflag [#allocation4], 1
    %608 = vsyncpa %s607, 1

</llo_original>
